<compile_context>
chip_gen: v7x
topology: tpu7x:2x2x1
jax: 0.10.0
libtpu: 0.0.40
codegen_flags: <defaults>
</compile_context>

<pallas_src>
import jax
import jax.numpy as jnp
from jax.experimental import pallas as pl
from jax.experimental.pallas import tpu as pltpu


def _round_up(n, m):
    return ((n + m - 1) // m) * m


def mlp_kernel(x_ref, w1_ref, b1_ref, w2_ref, b2_ref, w3_ref, b3_ref, o_ref):
    # hidden1: (bm, F) @ (F, 64) + (1, 64) -> ReLU   (f32 accumulation on the MXU)
    h1 = jnp.dot(x_ref[...], w1_ref[...], preferred_element_type=jnp.float32)
    h1 = jnp.maximum(h1 + b1_ref[...], 0.0)
    # hidden5: (bm, 64) @ (64, 8) + (1, 8) -> ReLU
    h2 = jnp.dot(h1, w2_ref[...], preferred_element_type=jnp.float32)
    h2 = jnp.maximum(h2 + b2_ref[...], 0.0)
    # out: (bm, 8) @ (8, O) + (1, O)  -- native-width store (masked vst is hidden under DMA)
    y = jnp.dot(h2, w3_ref[...], preferred_element_type=jnp.float32)
    o_ref[...] = (y + b3_ref[...]).astype(o_ref.dtype)


def _vmem_capacity_bytes():
    try:
        return int(pltpu.get_tpu_info().vmem_capacity_bytes)
    except Exception:
        return 64 << 20  # conservative (v7x-sized) fallback


def _estimate_vmem(bm, F, H1, H2, O, x_bytes):
    """Rough VMEM requirement for one pipelined grid step (double buffers + weights + work)."""
    x_tiles = 2 * bm * F * x_bytes                      # double-buffered streamed input tile
    o_tiles = 2 * bm * O * 4                            # double-buffered output tile
    wts = 2 * ((F * H1 + H1) * x_bytes + (H1 * H2 + H2 + H2 * O + O) * 4)
    lane = 128
    work = 4 * bm * max(_round_up(H1, lane), _round_up(H2, lane), _round_up(O, lane)) * 4
    return x_tiles + o_tiles + wts + work


def _pick_bm(B, F, H1, H2, O, x_bytes, vmem_cap, row_mult):
    """Largest batch tile that fits comfortably in VMEM (bigger slabs on 128 MiB parts)."""
    target = 1024 if vmem_cap >= (96 << 20) else 512
    bm = min(_round_up(target, row_mult), _round_up(B, row_mult))
    budget = int(vmem_cap * 0.55)
    while bm > row_mult and _estimate_vmem(bm, F, H1, H2, O, x_bytes) > budget:
        bm = _round_up(max(row_mult, bm // 2), row_mult)
    return max(row_mult, bm)


def net_easy_forward(x, params, *, bm=None, use_bf16=False):
    """x: (B, n_feature). params: dict of w1,b1,w2,b2,w3,b3 with weights stored (in, out)."""
    w1, b1 = params["w1"], params["b1"]   # (F, 64),  (1, 64)
    w2, b2 = params["w2"], params["b2"]   # (64, 8),  (1, 8)
    w3, b3 = params["w3"], params["b3"]   # (8, O),   (1, O)
    B, F = x.shape
    assert w1.shape[0] == F, "feature dim mismatch"
    H1, H2, O = w1.shape[1], w2.shape[1], w3.shape[1]

    x_dtype = jnp.bfloat16 if use_bf16 else jnp.float32
    x = x.astype(x_dtype)
    w1 = w1.astype(x_dtype)               # only the big (F, 64) weight matters for HBM traffic
    x_bytes = jnp.dtype(x_dtype).itemsize
    row_mult = 16 if x_bytes == 2 else 8  # sublane packing for the streamed x tile

    vmem_cap = _vmem_capacity_bytes()
    if bm is None:
        bm = _pick_bm(B, F, H1, H2, O, x_bytes, vmem_cap, row_mult)
    grid = (pl.cdiv(B, bm),)

    need = _estimate_vmem(bm, F, H1, H2, O, x_bytes)
    vmem_limit = int(min(max(32 << 20, need + (8 << 20)), vmem_cap - (8 << 20)))

    rep = lambda i: (0, 0)                # constant block index: weights DMA'd once, stay resident
    cost = pl.CostEstimate(
        flops=2 * B * (F * H1 + H1 * H2 + H2 * O),
        transcendentals=0,
        bytes_accessed=(B * F + F * H1) * x_bytes
        + 4 * (B * O + H1 + H1 * H2 + H2 + H2 * O + O),
    )

    out = pl.pallas_call(
        mlp_kernel,
        out_shape=jax.ShapeDtypeStruct((B, O), jnp.float32),
        grid_spec=pltpu.PrefetchScalarGridSpec(
            num_scalar_prefetch=0,
            grid=grid,
            in_specs=[
                pl.BlockSpec((bm, F), lambda i: (i, 0)),   # streamed x tile, native width
                pl.BlockSpec(w1.shape, rep),
                pl.BlockSpec(b1.shape, rep),
                pl.BlockSpec(w2.shape, rep),
                pl.BlockSpec(b2.shape, rep),
                pl.BlockSpec(w3.shape, rep),
                pl.BlockSpec(b3.shape, rep),
            ],
            out_specs=pl.BlockSpec((bm, O), lambda i: (i, 0)),
        ),
        compiler_params=pltpu.CompilerParams(
            dimension_semantics=("parallel",),
            vmem_limit_bytes=vmem_limit,
        ),
        cost_estimate=cost,
    )(x, w1, b1, w2, b2, w3, b3)
    return out


def init_params(key, n_feature, n_output):
    """Deterministic synthetic init (PyTorch-style uniform bounds); weights stored (in, out)
    so the kernel computes y = x @ W + b."""
    ks = jax.random.split(key, 6)

    def lin(kw, kb, fan_in, fan_out):
        bound = 1.0 / jnp.sqrt(float(fan_in))
        w = jax.random.uniform(kw, (fan_in, fan_out), jnp.float32, -bound, bound)
        b = jax.random.uniform(kb, (1, fan_out), jnp.float32, -bound, bound)
        return w, b

    w1, b1 = lin(ks[0], ks[1], n_feature, 64)
    w2, b2 = lin(ks[2], ks[3], 64, 8)
    w3, b3 = lin(ks[4], ks[5], 8, n_output)
    return {"w1": w1, "b1": b1, "w2": w2, "b2": b2, "w3": w3, "b3": b3}


def ref_forward(x, params):
    h = jnp.maximum(x @ params["w1"] + params["b1"], 0.0)
    h = jnp.maximum(h @ params["w2"] + params["b2"], 0.0)
    return h @ params["w3"] + params["b3"]


if __name__ == "__main__":
    key = jax.random.PRNGKey(0)

    # (B, n_feature, n_output, forced bm or None)
    cases = [
        (64, 32, 4, None),   # single-tile fast path
        (10, 7, 3, None),    # odd feature / ragged batch, native-width blocks
        (72, 16, 5, 32),     # multi-step grid with a masked partial last block
    ]
    for B, F, O, forced_bm in cases:
        k_x, k_p, key = jax.random.split(key, 3)
        x = jax.random.normal(k_x, (B, F), dtype=jnp.float32)
        params = init_params(k_p, F, O)

        out = jax.block_until_ready(net_easy_forward(x, params, bm=forced_bm))
        ref = ref_forward(x, params)
        assert out.shape == (B, O), out.shape
        assert jnp.allclose(out, ref, atol=1e-5, rtol=1e-5), \
            float(jnp.max(jnp.abs(out - ref)))

    # Optional bf16 activation/w1 path (f32 accumulation) - looser tolerance by construction.
    B, F, O = 64, 32, 4
    k_x, k_p, key = jax.random.split(key, 3)
    x = jax.random.normal(k_x, (B, F), dtype=jnp.float32)
    params = init_params(k_p, F, O)
    out_bf16 = jax.block_until_ready(net_easy_forward(x, params, use_bf16=True))
    ref = ref_forward(x, params)
    assert out_bf16.shape == (B, O)
    assert jnp.allclose(out_bf16, ref, atol=1e-1, rtol=1e-1), \
        float(jnp.max(jnp.abs(out_bf16 - ref)))

    print("KERNEL_OK")
</pallas_src>

<mosaic_0001>
module attributes {stable_mosaic.version = 11 : i64} {
  func.func @mlp_kernel(%arg0: i32, %arg1: memref<64x32xf32, #tpu.memory_space<vmem>>, %arg2: memref<32x64xf32, #tpu.memory_space<vmem>>, %arg3: memref<1x64xf32, #tpu.memory_space<vmem>>, %arg4: memref<64x8xf32, #tpu.memory_space<vmem>>, %arg5: memref<1x8xf32, #tpu.memory_space<vmem>>, %arg6: memref<8x4xf32, #tpu.memory_space<vmem>>, %arg7: memref<1x4xf32, #tpu.memory_space<vmem>>, %arg8: memref<64x4xf32, #tpu.memory_space<vmem>>) attributes {dimension_semantics = [#tpu.dimension_semantics<parallel>], iteration_bounds = array<i64: 1>, scalar_prefetch = 0 : i64, scratch_operands = 0 : i64, tpu.core_type = #tpu.core_type<tc>, window_params = [{transform_indices = @transform_0, window_bounds = array<i64: 64, 32>}, {pipeline_mode = #tpu.pipeline_mode<synchronous>, transform_indices = @transform_1, window_bounds = array<i64: 32, 64>}, {pipeline_mode = #tpu.pipeline_mode<synchronous>, transform_indices = @transform_2, window_bounds = array<i64: 1, 64>}, {pipeline_mode = #tpu.pipeline_mode<synchronous>, transform_indices = @transform_3, window_bounds = array<i64: 64, 8>}, {pipeline_mode = #tpu.pipeline_mode<synchronous>, transform_indices = @transform_4, window_bounds = array<i64: 1, 8>}, {pipeline_mode = #tpu.pipeline_mode<synchronous>, transform_indices = @transform_5, window_bounds = array<i64: 8, 4>}, {pipeline_mode = #tpu.pipeline_mode<synchronous>, transform_indices = @transform_6, window_bounds = array<i64: 1, 4>}, {transform_indices = @transform_7, window_bounds = array<i64: 64, 4>}]} {
    %c0 = arith.constant 0 : index
    %c0_0 = arith.constant 0 : index
    %0 = vector.load %arg1[%c0, %c0_0] : memref<64x32xf32, #tpu.memory_space<vmem>>, vector<64x32xf32>
    %c0_1 = arith.constant 0 : index
    %c0_2 = arith.constant 0 : index
    %1 = vector.load %arg2[%c0_1, %c0_2] : memref<32x64xf32, #tpu.memory_space<vmem>>, vector<32x64xf32>
    %cst = arith.constant dense<0.000000e+00> : vector<64x64xf32>
    %2 = tpu.matmul %0, %1, %cst {dimension_numbers = #tpu.dot_dimension_numbers<[1], [0], [0], [1], [0, 0, 1, 1], [], []>} : vector<64x32xf32>, vector<32x64xf32>, vector<64x64xf32> -> vector<64x64xf32>
    %c0_3 = arith.constant 0 : index
    %c0_4 = arith.constant 0 : index
    %3 = vector.load %arg3[%c0_3, %c0_4] : memref<1x64xf32, #tpu.memory_space<vmem>>, vector<1x64xf32>
    %4 = vector.broadcast %3 : vector<1x64xf32> to vector<64x64xf32>
    %5 = arith.addf %2, %4 : vector<64x64xf32>
    %cst_5 = arith.constant 0.000000e+00 : f32
    %6 = vector.broadcast %cst_5 : f32 to vector<64x64xf32>
    %7 = arith.maximumf %5, %6 : vector<64x64xf32>
    %c0_6 = arith.constant 0 : index
    %c0_7 = arith.constant 0 : index
    %8 = vector.load %arg4[%c0_6, %c0_7] : memref<64x8xf32, #tpu.memory_space<vmem>>, vector<64x8xf32>
    %cst_8 = arith.constant dense<0.000000e+00> : vector<64x8xf32>
    %9 = tpu.matmul %7, %8, %cst_8 {dimension_numbers = #tpu.dot_dimension_numbers<[1], [0], [0], [1], [0, 0, 1, 1], [], []>} : vector<64x64xf32>, vector<64x8xf32>, vector<64x8xf32> -> vector<64x8xf32>
    %c0_9 = arith.constant 0 : index
    %c0_10 = arith.constant 0 : index
    %10 = vector.load %arg5[%c0_9, %c0_10] : memref<1x8xf32, #tpu.memory_space<vmem>>, vector<1x8xf32>
    %11 = vector.broadcast %10 : vector<1x8xf32> to vector<64x8xf32>
    %12 = arith.addf %9, %11 : vector<64x8xf32>
    %cst_11 = arith.constant 0.000000e+00 : f32
    %13 = vector.broadcast %cst_11 : f32 to vector<64x8xf32>
    %14 = arith.maximumf %12, %13 : vector<64x8xf32>
    %c0_12 = arith.constant 0 : index
    %c0_13 = arith.constant 0 : index
    %15 = vector.load %arg6[%c0_12, %c0_13] : memref<8x4xf32, #tpu.memory_space<vmem>>, vector<8x4xf32>
    %cst_14 = arith.constant dense<0.000000e+00> : vector<64x4xf32>
    %16 = tpu.matmul %14, %15, %cst_14 {dimension_numbers = #tpu.dot_dimension_numbers<[1], [0], [0], [1], [0, 0, 1, 1], [], []>} : vector<64x8xf32>, vector<8x4xf32>, vector<64x4xf32> -> vector<64x4xf32>
    %c0_15 = arith.constant 0 : index
    %c0_16 = arith.constant 0 : index
    %17 = vector.load %arg7[%c0_15, %c0_16] : memref<1x4xf32, #tpu.memory_space<vmem>>, vector<1x4xf32>
    %18 = vector.broadcast %17 : vector<1x4xf32> to vector<64x4xf32>
    %19 = arith.addf %16, %18 : vector<64x4xf32>
    %c0_17 = arith.constant 0 : index
    %c0_18 = arith.constant 0 : index
    %20 = vector.load %arg8[%c0_17, %c0_18] : memref<64x4xf32, #tpu.memory_space<vmem>>, vector<64x4xf32>
    tpu.vector_store %arg8[%c0_17, %c0_18], %19 {strides = array<i32>} : memref<64x4xf32, #tpu.memory_space<vmem>>, vector<64x4xf32>,
    return
  }
  func.func @transform_0(%arg0: i32) -> (i32, i32) {
    %c0_i32 = arith.constant 0 : i32
    %c0_i32_0 = arith.constant 0 : i32
    return %arg0, %c0_i32 : i32, i32
  }
  func.func @transform_1(%arg0: i32) -> (i32, i32) {
    %c0_i32 = arith.constant 0 : i32
    %c0_i32_0 = arith.constant 0 : i32
    %c0_i32_1 = arith.constant 0 : i32
    return %c0_i32, %c0_i32_0 : i32, i32
  }
  func.func @transform_2(%arg0: i32) -> (i32, i32) {
    %c0_i32 = arith.constant 0 : i32
    %c0_i32_0 = arith.constant 0 : i32
    %c0_i32_1 = arith.constant 0 : i32
    return %c0_i32, %c0_i32_0 : i32, i32
  }
  func.func @transform_3(%arg0: i32) -> (i32, i32) {
    %c0_i32 = arith.constant 0 : i32
    %c0_i32_0 = arith.constant 0 : i32
    %c0_i32_1 = arith.constant 0 : i32
    return %c0_i32, %c0_i32_0 : i32, i32
  }
  func.func @transform_4(%arg0: i32) -> (i32, i32) {
    %c0_i32 = arith.constant 0 : i32
    %c0_i32_0 = arith.constant 0 : i32
    %c0_i32_1 = arith.constant 0 : i32
    return %c0_i32, %c0_i32_0 : i32, i32
  }
  func.func @transform_5(%arg0: i32) -> (i32, i32) {
    %c0_i32 = arith.constant 0 : i32
    %c0_i32_0 = arith.constant 0 : i32
    %c0_i32_1 = arith.constant 0 : i32
    return %c0_i32, %c0_i32_0 : i32, i32
  }
  func.func @transform_6(%arg0: i32) -> (i32, i32) {
    %c0_i32 = arith.constant 0 : i32
    %c0_i32_0 = arith.constant 0 : i32
    %c0_i32_1 = arith.constant 0 : i32
    return %c0_i32, %c0_i32_0 : i32, i32
  }
  func.func @transform_7(%arg0: i32) -> (i32, i32) {
    %c0_i32 = arith.constant 0 : i32
    %c0_i32_0 = arith.constant 0 : i32
    return %arg0, %c0_i32 : i32, i32
  }
}

</mosaic_0001>

<llo_original>
// kernel: tpu_custom_call.1
$region0: #{tpu_custom_call.1}
  #allocation0 [shape = 'u32[]', space=smem, size = 0x4, offset = 0x4, fixed_abs, tag = 'smem constant byte address 0x4 - core index']
  #allocation1 [shape = 'u32[144,128]{1,0:T(1,128)}', space=vmem, size = 0x12000, scoped, tag = 'internal scratch']
  %s0 = inlined_call_operand.vmem [shape: f32[64,32], index: 0, kind: input, shape index: {}]
  %s1 = inlined_call_operand.vmem [shape: f32[32,64], index: 1, kind: input, shape index: {}]
  %s2 = inlined_call_operand.vmem [shape: f32[1,64], index: 2, kind: input, shape index: {}]
  %s3 = inlined_call_operand.vmem [shape: f32[64,8], index: 3, kind: input, shape index: {}]
  %s4 = inlined_call_operand.vmem [shape: f32[1,8], index: 4, kind: input, shape index: {}]
  %s5 = inlined_call_operand.vmem [shape: f32[8,4], index: 5, kind: input, shape index: {}]
  %s6 = inlined_call_operand.vmem [shape: f32[1,4], index: 6, kind: input, shape index: {}]
  %s7 = inlined_call_operand.vmem [shape: f32[64,4], index: 7, kind: output, shape index: {}]
  %s8 = sld [smem:[#allocation0]]
  $region38: #{tpu_custom_call.1} parent=0
    _
  %s10 = ssub.s32 1, %s8
  %s11 = scalar_select 0, %s10, %s8
  // Predicated region
  $region2: #{tpu_custom_call.1} parent=0 // pred_check
    _
  $region3: #{tpu_custom_call.1} parent=0 // pred_check_branch
    %13 = sbr.rel (0) target = $region5
  $region4: #{tpu_custom_call.1} parent=0 // pred_region
    _
  $region5: #{tpu_custom_call.1} parent=0 // pred_fallthru
    _
  // Predicated region
  $region6: #{tpu_custom_call.1} parent=0 // pred_check
    _
  $region7: #{tpu_custom_call.1} parent=0 // pred_check_branch
    %15 = sbr.rel (0) target = $region9
  $region8: #{tpu_custom_call.1} parent=0 // pred_region
    _
  $region9: #{tpu_custom_call.1} parent=0 // pred_fallthru
    _
  // Predicated region
  $region10: #{tpu_custom_call.1} parent=0 // pred_check
    _
  $region11: #{tpu_custom_call.1} parent=0 // pred_check_branch
    %17 = sbr.rel (0) target = $region13
  $region12: #{tpu_custom_call.1} parent=0 // pred_region
    _
  $region13: #{tpu_custom_call.1} parent=0 // pred_fallthru
    _
  // Predicated region
  $region14: #{tpu_custom_call.1} parent=0 // pred_check
    _
  $region15: #{tpu_custom_call.1} parent=0 // pred_check_branch
    %19 = sbr.rel (0) target = $region17
  $region16: #{tpu_custom_call.1} parent=0 // pred_region
    _
  $region17: #{tpu_custom_call.1} parent=0 // pred_fallthru
    _
  // Predicated region
  $region18: #{tpu_custom_call.1} parent=0 // pred_check
    _
  $region19: #{tpu_custom_call.1} parent=0 // pred_check_branch
    %21 = sbr.rel (0) target = $region21
  $region20: #{tpu_custom_call.1} parent=0 // pred_region
    _
  $region21: #{tpu_custom_call.1} parent=0 // pred_fallthru
    _
  // Predicated region
  $region22: #{tpu_custom_call.1} parent=0 // pred_check
    _
  $region23: #{tpu_custom_call.1} parent=0 // pred_check_branch
    %23 = sbr.rel (0) target = $region25
  $region24: #{tpu_custom_call.1} parent=0 // pred_region
    _
  $region25: #{tpu_custom_call.1} parent=0 // pred_fallthru
    _
  // Predicated region
  $region26: #{tpu_custom_call.1} parent=0 // pred_check
    _
  $region27: #{tpu_custom_call.1} parent=0 // pred_check_branch
    %25 = sbr.rel (0) target = $region29
  $region28: #{tpu_custom_call.1} parent=0 // pred_region
    _
  $region29: #{tpu_custom_call.1} parent=0 // pred_fallthru
    _
  %v26 = vld [vmem:[%s0] sm:$0xff]
  %v27 = vld [vmem:[%s0 + $0x8] sm:$0xff]
  %v28 = vld [vmem:[%s0 + $0x10] sm:$0xff]
  %v29 = vld [vmem:[%s0 + $0x18] sm:$0xff]
  %v30 = vld [vmem:[%s0 + $0x20] sm:$0xff]
  %v31 = vld [vmem:[%s0 + $0x28] sm:$0xff]
  %v32 = vld [vmem:[%s0 + $0x30] sm:$0xff]
  %v33 = vld [vmem:[%s0 + $0x38] sm:$0xff]
  %v34 = vld [vmem:[%s1] sm:$0xff]
  %v35 = vld [vmem:[%s1 + $0x8] sm:$0xff]
  %v36 = vld [vmem:[%s1 + $0x10] sm:$0xff]
  %v37 = vld [vmem:[%s1 + $0x18] sm:$0xff]
  %v38 = vld [vmem:[%s2] sm:$0x1]
  %v40 = vlaneseq
  %v41 = vshrl.u32 %v40, 7
  %v42 = vsub.s32 0, %v41
  %v43 = vrot.slane %v38, %v42
  %vm45 = vcmask 261120
  %v47 = vsel %vm45, %v26, 0
  %v50 = vsel %vm45, %v27, 0
  %v53 = vsel %vm45, %v28, 0
  %v56 = vsel %vm45, %v29, 0
  %v59 = vsel %vm45, %v30, 0
  %v62 = vsel %vm45, %v31, 0
  %v65 = vsel %vm45, %v32, 0
  %v68 = vsel %vm45, %v33, 0
  %70 = vmatprep.subr.mxu0 0.0
  %71 = vmatpush1.msra.mxu0 %v34
  %72 = vmatprep.subr.mxu0 0.0
  %73 = vmatpush1.msra.mxu0 %v35
  %74 = vmatprep.subr.mxu0 0.0
  %75 = vmatpush1.msra.mxu0 %v36
  %76 = vmatprep.subr.mxu0 0.0
  %77 = vmatpush1.msra.mxu0 %v37
  %78 = vmatprep.subr.mxu0 0.0
  %79 = vmatpush1.msra.mxu0 0.0
  %80 = vmatprep.subr.mxu0 0.0
  %81 = vmatpush1.msra.mxu0 0.0
  %82 = vmatprep.subr.mxu0 0.0
  %83 = vmatpush1.msra.mxu0 0.0
  %84 = vmatprep.subr.mxu0 0.0
  %85 = vmatpush1.msra.mxu0 0.0
  %86 = vmatprep.subr.mxu0 0.0
  %87 = vmatpush1.msra.mxu0 0.0
  %88 = vmatprep.subr.mxu0 0.0
  %89 = vmatpush1.msra.mxu0 0.0
  %90 = vmatprep.subr.mxu0 0.0
  %91 = vmatpush1.msra.mxu0 0.0
  %92 = vmatprep.subr.mxu0 0.0
  %93 = vmatpush1.msra.mxu0 0.0
  %94 = vmatprep.subr.mxu0 0.0
  %95 = vmatpush1.msra.mxu0 0.0
  %96 = vmatprep.subr.mxu0 0.0
  %97 = vmatpush1.msra.mxu0 0.0
  %98 = vmatprep.subr.mxu0 0.0
  %99 = vmatpush1.msra.mxu0 0.0
  %100 = vmatprep.subr.mxu0 0.0
  %101 = vmatpush1.msra.mxu0 0.0
  %102 = vmatprep.subr.mxu0 0.0
  %103 = vmatpush1.msra.mxu0 0.0
  %104 = vmatprep.subr.mxu0 0.0
  %105 = vmatpush1.msra.mxu0 0.0
  %106 = vmatprep.subr.mxu0 0.0
  %107 = vmatpush1.msra.mxu0 0.0
  %108 = vmatprep.subr.mxu0 0.0
  %109 = vmatpush1.msra.mxu0 0.0
  %110 = vmatprep.subr.mxu0 0.0
  %111 = vmatpush1.msra.mxu0 0.0
  %112 = vmatprep.subr.mxu0 0.0
  %113 = vmatpush1.msra.mxu0 0.0
  %114 = vmatprep.subr.mxu0 0.0
  %115 = vmatpush1.msra.mxu0 0.0
  %116 = vmatprep.subr.mxu0 0.0
  %117 = vmatpush1.msra.mxu0 0.0
  %118 = vmatprep.subr.mxu0 0.0
  %119 = vmatpush1.msra.mxu0 0.0
  %120 = vmatprep.subr.mxu0 0.0
  %121 = vmatpush1.msra.mxu0 0.0
  %122 = vmatprep.subr.mxu0 0.0
  %123 = vmatpush1.msra.mxu0 0.0
  %124 = vmatprep.subr.mxu0 0.0
  %125 = vmatpush1.msra.mxu0 0.0
  %126 = vmatprep.subr.mxu0 0.0
  %127 = vmatpush1.msra.mxu0 0.0
  %128 = vmatprep.subr.mxu0 0.0
  %129 = vmatpush1.msra.mxu0 0.0
  %130 = vmatprep.subr.mxu0 0.0
  %131 = vmatpush1.msra.mxu0 0.0
  %132 = vmatprep.subr.mxu0 0.0
  %133 = vmatpush1.msra.mxu0 0.0
  %134 = vmatprep.mubr.f32.mxu0 0.0
  %135 = vmatmul.mubr.f32.gmra.mrb[0].mxu0 %v47
  %v136 = vpop.f32.mrb[0].mxu0
  %v137 = vadd.f32 %v43, %v136
  %v138 = vpop.f32.mrb[0].mxu0
  %139 = vmatprep.mubr.f32.mxu0 0.0
  %140 = vmatmul.mubr.f32.gmra.mrb[0].mxu0 %v50
  %v141 = vpop.f32.mrb[0].mxu0
  %v142 = vadd.f32 %v43, %v141
  %v143 = vpop.f32.mrb[0].mxu0
  %144 = vmatprep.mubr.f32.mxu0 0.0
  %145 = vmatmul.mubr.f32.gmra.mrb[0].mxu0 %v53
  %v146 = vpop.f32.mrb[0].mxu0
  %v147 = vadd.f32 %v43, %v146
  %v148 = vpop.f32.mrb[0].mxu0
  %149 = vmatprep.mubr.f32.mxu0 0.0
  %150 = vmatmul.mubr.f32.gmra.mrb[0].mxu0 %v56
  %v151 = vpop.f32.mrb[0].mxu0
  %v152 = vadd.f32 %v43, %v151
  %v153 = vpop.f32.mrb[0].mxu0
  %154 = vmatprep.mubr.f32.mxu0 0.0
  %155 = vmatmul.mubr.f32.gmra.mrb[0].mxu0 %v59
  %v156 = vpop.f32.mrb[0].mxu0
  %v157 = vadd.f32 %v43, %v156
  %v158 = vpop.f32.mrb[0].mxu0
  %159 = vmatprep.mubr.f32.mxu0 0.0
  %160 = vmatmul.mubr.f32.gmra.mrb[0].mxu0 %v62
  %v161 = vpop.f32.mrb[0].mxu0
  %v162 = vadd.f32 %v43, %v161
  %v163 = vpop.f32.mrb[0].mxu0
  %164 = vmatprep.mubr.f32.mxu0 0.0
  %165 = vmatmul.mubr.f32.gmra.mrb[0].mxu0 %v65
  %v166 = vpop.f32.mrb[0].mxu0
  %v167 = vadd.f32 %v43, %v166
  %v168 = vpop.f32.mrb[0].mxu0
  %169 = vmatprep.mubr.f32.mxu0 0.0
  %170 = vmatmul.mubr.f32.gmra.mrb[0].mxu0 %v68
  %v171 = vpop.f32.mrb[0].mxu0
  %v172 = vadd.f32 %v43, %v171
  %v173 = vpop.f32.mrb[0].mxu0
  %174 = vdwg.mxu0
  %v175 = vmax.f32 %v137, 0.0
  %v176 = vmax.f32 %v142, 0.0
  %v177 = vmax.f32 %v147, 0.0
  %v178 = vmax.f32 %v152, 0.0
  %v179 = vmax.f32 %v157, 0.0
  %v180 = vmax.f32 %v162, 0.0
  %v181 = vmax.f32 %v167, 0.0
  %v182 = vmax.f32 %v172, 0.0
  %v183 = vld [vmem:[%s3] sm:$0xff]
  %v184 = vld [vmem:[%s3 + $0x8] sm:$0xff]
  %v185 = vld [vmem:[%s3 + $0x10] sm:$0xff]
  %v186 = vld [vmem:[%s3 + $0x18] sm:$0xff]
  %v187 = vld [vmem:[%s3 + $0x20] sm:$0xff]
  %v188 = vld [vmem:[%s3 + $0x28] sm:$0xff]
  %v189 = vld [vmem:[%s3 + $0x30] sm:$0xff]
  %v190 = vld [vmem:[%s3 + $0x38] sm:$0xff]
  %v191 = vld [vmem:[%s4] sm:$0x1]
  %v193 = vlaneseq
  %v194 = vshrl.u32 %v193, 7
  %v195 = vsub.s32 0, %v194
  %v196 = vrot.slane %v191, %v195
  %vm198 = vcmask 523264
  %v200 = vsel %vm198, %v175, 0
  %v203 = vsel %vm198, %v176, 0
  %v206 = vsel %vm198, %v177, 0
  %v209 = vsel %vm198, %v178, 0
  %v212 = vsel %vm198, %v179, 0
  %v215 = vsel %vm198, %v180, 0
  %v218 = vsel %vm198, %v181, 0
  %v221 = vsel %vm198, %v182, 0
  %223 = vmatprep.subr.mxu0 0.0
  %224 = vmatpush1.msra.mxu0 %v183
  %225 = vmatprep.subr.mxu0 0.0
  %226 = vmatpush1.msra.mxu0 %v184
  %227 = vmatprep.subr.mxu0 0.0
  %228 = vmatpush1.msra.mxu0 %v185
  %229 = vmatprep.subr.mxu0 0.0
  %230 = vmatpush1.msra.mxu0 %v186
  %231 = vmatprep.subr.mxu0 0.0
  %232 = vmatpush1.msra.mxu0 %v187
  %233 = vmatprep.subr.mxu0 0.0
  %234 = vmatpush1.msra.mxu0 %v188
  %235 = vmatprep.subr.mxu0 0.0
  %236 = vmatpush1.msra.mxu0 %v189
  %237 = vmatprep.subr.mxu0 0.0
  %238 = vmatpush1.msra.mxu0 %v190
  %239 = vmatprep.subr.mxu0 0.0
  %240 = vmatpush1.msra.mxu0 0.0
  %241 = vmatprep.subr.mxu0 0.0
  %242 = vmatpush1.msra.mxu0 0.0
  %243 = vmatprep.subr.mxu0 0.0
  %244 = vmatpush1.msra.mxu0 0.0
  %245 = vmatprep.subr.mxu0 0.0
  %246 = vmatpush1.msra.mxu0 0.0
  %247 = vmatprep.subr.mxu0 0.0
  %248 = vmatpush1.msra.mxu0 0.0
  %249 = vmatprep.subr.mxu0 0.0
  %250 = vmatpush1.msra.mxu0 0.0
  %251 = vmatprep.subr.mxu0 0.0
  %252 = vmatpush1.msra.mxu0 0.0
  %253 = vmatprep.subr.mxu0 0.0
  %254 = vmatpush1.msra.mxu0 0.0
  %255 = vmatprep.subr.mxu0 0.0
  %256 = vmatpush1.msra.mxu0 0.0
  %257 = vmatprep.subr.mxu0 0.0
  %258 = vmatpush1.msra.mxu0 0.0
  %259 = vmatprep.subr.mxu0 0.0
  %260 = vmatpush1.msra.mxu0 0.0
  %261 = vmatprep.subr.mxu0 0.0
  %262 = vmatpush1.msra.mxu0 0.0
  %263 = vmatprep.subr.mxu0 0.0
  %264 = vmatpush1.msra.mxu0 0.0
  %265 = vmatprep.subr.mxu0 0.0
  %266 = vmatpush1.msra.mxu0 0.0
  %267 = vmatprep.subr.mxu0 0.0
  %268 = vmatpush1.msra.mxu0 0.0
  %269 = vmatprep.subr.mxu0 0.0
  %270 = vmatpush1.msra.mxu0 0.0
  %271 = vmatprep.subr.mxu0 0.0
  %272 = vmatpush1.msra.mxu0 0.0
  %273 = vmatprep.subr.mxu0 0.0
  %274 = vmatpush1.msra.mxu0 0.0
  %275 = vmatprep.subr.mxu0 0.0
  %276 = vmatpush1.msra.mxu0 0.0
  %277 = vmatprep.subr.mxu0 0.0
  %278 = vmatpush1.msra.mxu0 0.0
  %279 = vmatprep.subr.mxu0 0.0
  %280 = vmatpush1.msra.mxu0 0.0
  %281 = vmatprep.subr.mxu0 0.0
  %282 = vmatpush1.msra.mxu0 0.0
  %283 = vmatprep.subr.mxu0 0.0
  %284 = vmatpush1.msra.mxu0 0.0
  %285 = vmatprep.subr.mxu0 0.0
  %286 = vmatpush1.msra.mxu0 0.0
  %287 = vmatprep.mubr.f32.mxu0 0.0
  %288 = vmatmul.mubr.f32.gmra.mrb[0].mxu0 %v200
  %v289 = vpop.f32.mrb[0].mxu0
  %v290 = vadd.f32 %v196, %v289
  %v291 = vpop.f32.mrb[0].mxu0
  %292 = vmatprep.mubr.f32.mxu0 0.0
  %293 = vmatmul.mubr.f32.gmra.mrb[0].mxu0 %v203
  %v294 = vpop.f32.mrb[0].mxu0
  %v295 = vadd.f32 %v196, %v294
  %v296 = vpop.f32.mrb[0].mxu0
  %297 = vmatprep.mubr.f32.mxu0 0.0
  %298 = vmatmul.mubr.f32.gmra.mrb[0].mxu0 %v206
  %v299 = vpop.f32.mrb[0].mxu0
  %v300 = vadd.f32 %v196, %v299
  %v301 = vpop.f32.mrb[0].mxu0
  %302 = vmatprep.mubr.f32.mxu0 0.0
  %303 = vmatmul.mubr.f32.gmra.mrb[0].mxu0 %v209
  %v304 = vpop.f32.mrb[0].mxu0
  %v305 = vadd.f32 %v196, %v304
  %v306 = vpop.f32.mrb[0].mxu0
  %307 = vmatprep.mubr.f32.mxu0 0.0
  %308 = vmatmul.mubr.f32.gmra.mrb[0].mxu0 %v212
  %v309 = vpop.f32.mrb[0].mxu0
  %v310 = vadd.f32 %v196, %v309
  %v311 = vpop.f32.mrb[0].mxu0
  %312 = vmatprep.mubr.f32.mxu0 0.0
  %313 = vmatmul.mubr.f32.gmra.mrb[0].mxu0 %v215
  %v314 = vpop.f32.mrb[0].mxu0
  %v315 = vadd.f32 %v196, %v314
  %v316 = vpop.f32.mrb[0].mxu0
  %317 = vmatprep.mubr.f32.mxu0 0.0
  %318 = vmatmul.mubr.f32.gmra.mrb[0].mxu0 %v218
  %v319 = vpop.f32.mrb[0].mxu0
  %v320 = vadd.f32 %v196, %v319
  %v321 = vpop.f32.mrb[0].mxu0
  %322 = vmatprep.mubr.f32.mxu0 0.0
  %323 = vmatmul.mubr.f32.gmra.mrb[0].mxu0 %v221
  %v324 = vpop.f32.mrb[0].mxu0
  %v325 = vadd.f32 %v196, %v324
  %v326 = vpop.f32.mrb[0].mxu0
  %327 = vdwg.mxu0
  %v328 = vmax.f32 %v290, 0.0
  %v329 = vmax.f32 %v295, 0.0
  %v330 = vmax.f32 %v300, 0.0
  %v331 = vmax.f32 %v305, 0.0
  %v332 = vmax.f32 %v310, 0.0
  %v333 = vmax.f32 %v315, 0.0
  %v334 = vmax.f32 %v320, 0.0
  %v335 = vmax.f32 %v325, 0.0
  %v336 = vld [vmem:[%s5] sm:$0xff]
  %v337 = vld [vmem:[%s6] sm:$0x1]
  %v339 = vlaneseq
  %v340 = vshrl.u32 %v339, 7
  %v341 = vsub.s32 0, %v340
  %v342 = vrot.slane %v337, %v341
  %vm344 = vcmask 64512
  %v346 = vsel %vm344, %v328, 0
  %v349 = vsel %vm344, %v329, 0
  %v352 = vsel %vm344, %v330, 0
  %v355 = vsel %vm344, %v331, 0
  %v358 = vsel %vm344, %v332, 0
  %v361 = vsel %vm344, %v333, 0
  %v364 = vsel %vm344, %v334, 0
  %v367 = vsel %vm344, %v335, 0
  %369 = vmatprep.subr.mxu0 0.0
  %370 = vmatpush1.msra.mxu0 %v336
  %371 = vmatprep.subr.mxu0 0.0
  %372 = vmatpush1.msra.mxu0 0.0
  %373 = vmatprep.subr.mxu0 0.0
  %374 = vmatpush1.msra.mxu0 0.0
  %375 = vmatprep.subr.mxu0 0.0
  %376 = vmatpush1.msra.mxu0 0.0
  %377 = vmatprep.subr.mxu0 0.0
  %378 = vmatpush1.msra.mxu0 0.0
  %379 = vmatprep.subr.mxu0 0.0
  %380 = vmatpush1.msra.mxu0 0.0
  %381 = vmatprep.subr.mxu0 0.0
  %382 = vmatpush1.msra.mxu0 0.0
  %383 = vmatprep.subr.mxu0 0.0
  %384 = vmatpush1.msra.mxu0 0.0
  %385 = vmatprep.subr.mxu0 0.0
  %386 = vmatpush1.msra.mxu0 0.0
  %387 = vmatprep.subr.mxu0 0.0
  %388 = vmatpush1.msra.mxu0 0.0
  %389 = vmatprep.subr.mxu0 0.0
  %390 = vmatpush1.msra.mxu0 0.0
  %391 = vmatprep.subr.mxu0 0.0
  %392 = vmatpush1.msra.mxu0 0.0
  %393 = vmatprep.subr.mxu0 0.0
  %394 = vmatpush1.msra.mxu0 0.0
  %395 = vmatprep.subr.mxu0 0.0
  %396 = vmatpush1.msra.mxu0 0.0
  %397 = vmatprep.subr.mxu0 0.0
  %398 = vmatpush1.msra.mxu0 0.0
  %399 = vmatprep.subr.mxu0 0.0
  %400 = vmatpush1.msra.mxu0 0.0
  %401 = vmatprep.subr.mxu0 0.0
  %402 = vmatpush1.msra.mxu0 0.0
  %403 = vmatprep.subr.mxu0 0.0
  %404 = vmatpush1.msra.mxu0 0.0
  %405 = vmatprep.subr.mxu0 0.0
  %406 = vmatpush1.msra.mxu0 0.0
  %407 = vmatprep.subr.mxu0 0.0
  %408 = vmatpush1.msra.mxu0 0.0
  %409 = vmatprep.subr.mxu0 0.0
  %410 = vmatpush1.msra.mxu0 0.0
  %411 = vmatprep.subr.mxu0 0.0
  %412 = vmatpush1.msra.mxu0 0.0
  %413 = vmatprep.subr.mxu0 0.0
  %414 = vmatpush1.msra.mxu0 0.0
  %415 = vmatprep.subr.mxu0 0.0
  %416 = vmatpush1.msra.mxu0 0.0
  %417 = vmatprep.subr.mxu0 0.0
  %418 = vmatpush1.msra.mxu0 0.0
  %419 = vmatprep.subr.mxu0 0.0
  %420 = vmatpush1.msra.mxu0 0.0
  %421 = vmatprep.subr.mxu0 0.0
  %422 = vmatpush1.msra.mxu0 0.0
  %423 = vmatprep.subr.mxu0 0.0
  %424 = vmatpush1.msra.mxu0 0.0
  %425 = vmatprep.subr.mxu0 0.0
  %426 = vmatpush1.msra.mxu0 0.0
  %427 = vmatprep.subr.mxu0 0.0
  %428 = vmatpush1.msra.mxu0 0.0
  %429 = vmatprep.subr.mxu0 0.0
  %430 = vmatpush1.msra.mxu0 0.0
  %431 = vmatprep.subr.mxu0 0.0
  %432 = vmatpush1.msra.mxu0 0.0
  %433 = vmatprep.mubr.f32.mxu0 0.0
  %434 = vmatmul.mubr.f32.gmra.mrb[0].mxu0 %v346
  %v435 = vpop.f32.mrb[0].mxu0
  %v436 = vadd.f32 %v342, %v435
  %v437 = vpop.f32.mrb[0].mxu0
  %438 = vmatprep.mubr.f32.mxu0 0.0
  %439 = vmatmul.mubr.f32.gmra.mrb[0].mxu0 %v349
  %v440 = vpop.f32.mrb[0].mxu0
  %v441 = vadd.f32 %v342, %v440
  %v442 = vpop.f32.mrb[0].mxu0
  %443 = vmatprep.mubr.f32.mxu0 0.0
  %444 = vmatmul.mubr.f32.gmra.mrb[0].mxu0 %v352
  %v445 = vpop.f32.mrb[0].mxu0
  %v446 = vadd.f32 %v342, %v445
  %v447 = vpop.f32.mrb[0].mxu0
  %448 = vmatprep.mubr.f32.mxu0 0.0
  %449 = vmatmul.mubr.f32.gmra.mrb[0].mxu0 %v355
  %v450 = vpop.f32.mrb[0].mxu0
  %v451 = vadd.f32 %v342, %v450
  %v452 = vpop.f32.mrb[0].mxu0
  %453 = vmatprep.mubr.f32.mxu0 0.0
  %454 = vmatmul.mubr.f32.gmra.mrb[0].mxu0 %v358
  %v455 = vpop.f32.mrb[0].mxu0
  %v456 = vadd.f32 %v342, %v455
  %v457 = vpop.f32.mrb[0].mxu0
  %458 = vmatprep.mubr.f32.mxu0 0.0
  %459 = vmatmul.mubr.f32.gmra.mrb[0].mxu0 %v361
  %v460 = vpop.f32.mrb[0].mxu0
  %v461 = vadd.f32 %v342, %v460
  %v462 = vpop.f32.mrb[0].mxu0
  %463 = vmatprep.mubr.f32.mxu0 0.0
  %464 = vmatmul.mubr.f32.gmra.mrb[0].mxu0 %v364
  %v465 = vpop.f32.mrb[0].mxu0
  %v466 = vadd.f32 %v342, %v465
  %v467 = vpop.f32.mrb[0].mxu0
  %468 = vmatprep.mubr.f32.mxu0 0.0
  %469 = vmatmul.mubr.f32.gmra.mrb[0].mxu0 %v367
  %v470 = vpop.f32.mrb[0].mxu0
  %v471 = vadd.f32 %v342, %v470
  %v472 = vpop.f32.mrb[0].mxu0
  %473 = vdwg.mxu0
  %vm474 = vcmask 31744
  %475 = vst.msk [vmem:[%s7] sm:$0xff] %vm474, %v436
  %476 = vst.msk [vmem:[%s7 + $0x8] sm:$0xff] %vm474, %v441
  %477 = vst.msk [vmem:[%s7 + $0x10] sm:$0xff] %vm474, %v446
  %478 = vst.msk [vmem:[%s7 + $0x18] sm:$0xff] %vm474, %v451
  %479 = vst.msk [vmem:[%s7 + $0x20] sm:$0xff] %vm474, %v456
  %480 = vst.msk [vmem:[%s7 + $0x28] sm:$0xff] %vm474, %v461
  %481 = vst.msk [vmem:[%s7 + $0x30] sm:$0xff] %vm474, %v466
  %482 = vst.msk [vmem:[%s7 + $0x38] sm:$0xff] %vm474, %v471
  // Predicated region
  $region30: #{tpu_custom_call.1} parent=0 // pred_check
    _
  $region31: #{tpu_custom_call.1} parent=0 // pred_check_branch
    %484 = sbr.rel (0) target = $region33
  $region32: #{tpu_custom_call.1} parent=0 // pred_region
    _
  $region33: #{tpu_custom_call.1} parent=0 // pred_fallthru
    _
  // Predicated region
  $region34: #{tpu_custom_call.1} parent=0 // pred_check
    _
  $region35: #{tpu_custom_call.1} parent=0 // pred_check_branch
    %486 = sbr.rel (0) target = $region37
  $region36: #{tpu_custom_call.1} parent=0 // pred_region
    _
  $region37: #{tpu_custom_call.1} parent=0 // pred_fallthru
    _

</llo_original>
